<compile_context>
chip_gen: v7x
topology: tpu7x:2x2x1
jax: 0.10.0
libtpu: 0.0.40
codegen_flags: <defaults>
</compile_context>

<pallas_src>
import functools

import jax
import jax.numpy as jnp
import numpy as np
from jax.experimental import pallas as pl
from jax.experimental.pallas import tpu as pltpu


def _box_blur_matrix(n: int, k: int) -> jnp.ndarray:
    """1D normalized box-blur operator with PyTorch 'reflect' boundary handling."""
    r = k // 2
    A = np.zeros((n, n), dtype=np.float32)
    for i in range(n):
        for d in range(-r, r + 1):
            j = i + d
            if j < 0:
                j = -j
            elif j >= n:
                j = 2 * n - 2 - j
            A[i, j] += 1.0 / k
    return jnp.asarray(A)


def _guided_blur_kernel(eps, mxu_dtype,
                        g_ref, p_ref, ah_ref, awt_ref, o_ref,
                        mean_i_scr, inv_denom_scr):
    # g_ref:   (1, 1, H, W)  guidance tile (grayscale), grid-invariant in c
    # p_ref:   (1, 1, H, W)  input tile for channel c
    # ah_ref:  (H, H)        height box-blur operator (grid-invariant)
    # awt_ref: (W, W)        transposed width box-blur operator (grid-invariant)
    # o_ref:   (1, 1, H, W)  output tile
    # mean_i_scr, inv_denom_scr: (H, W) f32 VMEM scratch, filled at c == 0.
    H = g_ref.shape[2]
    W = g_ref.shape[3]

    Ah = ah_ref[...].astype(mxu_dtype)
    AwT = awt_ref[...].astype(mxu_dtype)

    def box_blur_pair(x, y):
        # box_blur(X) = Ah @ X @ AwT.  Batch two fields per call:
        #  stage 1 (W blur): stack along sublanes -> one (2H,W)@(W,W) matmul
        #                    with the constant RHS AwT pushed to MXU once.
        z = jnp.concatenate([x, y], axis=0).astype(mxu_dtype)          # (2H, W)
        t = jnp.dot(z, AwT, preferred_element_type=jnp.float32)        # (2H, W)
        #  stage 2 (H blur): concat along lanes -> one (H,H)@(H,2W) matmul.
        t2 = jnp.concatenate([t[:H], t[H:]], axis=1).astype(mxu_dtype)  # (H, 2W)
        r = jnp.dot(Ah, t2, preferred_element_type=jnp.float32)         # (H, 2W)
        return r[:, :W], r[:, W:]

    I = g_ref[0, 0].astype(jnp.float32)

    # Guidance statistics: computed once per batch (channel axis is inner &
    # "arbitrary"), cached in VMEM scratch.  Reciprocal hoisted here too.
    @pl.when(pl.program_id(1) == 0)
    def _():
        mean_I, corr_I = box_blur_pair(I, I * I)
        var_I = corr_I - mean_I * mean_I
        mean_i_scr[...] = mean_I
        inv_denom_scr[...] = pl.reciprocal(var_I + eps)

    mean_I = mean_i_scr[...]
    inv_denom = inv_denom_scr[...]

    p = p_ref[0, 0].astype(jnp.float32)
    mean_p, corr_Ip = box_blur_pair(p, I * p)
    cov_Ip = corr_Ip - mean_I * mean_p
    a = cov_Ip * inv_denom
    b = mean_p - a * mean_I
    mean_a, mean_b = box_blur_pair(a, b)
    o_ref[0, 0] = (mean_a * I + mean_b).astype(o_ref.dtype)


def _vmem_limit_bytes(H, W, itemsize):
    blk = H * W
    io_blocks = 2 * 3 * blk * itemsize            # g, p, out (double-buffered)
    const = 2 * (H * H + W * W) * 4               # Ah, AwT (double-buffered)
    scratch = 2 * blk * 4                         # mean_I, inv_denom
    work = 32 * blk * 4                           # live f32 temporaries headroom
    est = io_blocks + const + scratch + work
    return int(min(max(est, 32 * 1024 * 1024), 100 * 1024 * 1024))


def guided_blur_pallas(guidance, inp, kernel_size, eps,
                       border_type="reflect", subsample=1,
                       mxu_dtype=jnp.bfloat16):
    assert border_type == "reflect", "only 'reflect' border implemented"
    assert subsample == 1  # TODO(synk): fast-guided-filter subsample>1 (nearest/bilinear interpolate) not implemented
    B, Cg, H, W = guidance.shape
    assert Cg == 1  # TODO(synk): multichannel-guidance path (per-pixel CxC torch.linalg.solve) not implemented
    Bi, Ci, Hi, Wi = inp.shape
    assert Bi == B and (Hi, Wi) == (H, W)
    # TODO(synk): tensor-valued (per-batch) eps not implemented; scalar only.

    if isinstance(kernel_size, int):
        ky = kx = kernel_size
    else:
        ky, kx = kernel_size

    Ah = _box_blur_matrix(H, ky)
    AwT = _box_blur_matrix(W, kx).T

    kernel = functools.partial(_guided_blur_kernel, float(eps), mxu_dtype)
    return pl.pallas_call(
        kernel,
        out_shape=jax.ShapeDtypeStruct((B, Ci, H, W), inp.dtype),
        grid_spec=pltpu.PrefetchScalarGridSpec(
            num_scalar_prefetch=0,
            grid=(B, Ci),
            in_specs=[
                pl.BlockSpec((1, 1, H, W), lambda b, c: (b, 0, 0, 0)),
                pl.BlockSpec((1, 1, H, W), lambda b, c: (b, c, 0, 0)),
                pl.BlockSpec((H, H), lambda b, c: (0, 0)),
                pl.BlockSpec((W, W), lambda b, c: (0, 0)),
            ],
            out_specs=pl.BlockSpec((1, 1, H, W), lambda b, c: (b, c, 0, 0)),
            scratch_shapes=[
                pltpu.VMEM((H, W), jnp.float32),   # mean_I
                pltpu.VMEM((H, W), jnp.float32),   # 1 / (var_I + eps)
            ],
        ),
        compiler_params=pltpu.CompilerParams(
            dimension_semantics=("parallel", "arbitrary"),
            vmem_limit_bytes=_vmem_limit_bytes(H, W, jnp.dtype(inp.dtype).itemsize),
        ),
    )(guidance, inp, Ah, AwT)


class GuidedBlur:
    """Pallas-TPU port of kornia.filters.GuidedBlur (grayscale guidance path)."""

    def __init__(self, kernel_size, eps, border_type="reflect", subsample=1,
                 precision="bf16"):
        self.kernel_size = kernel_size
        self.eps = eps
        self.border_type = border_type
        self.subsample = subsample
        self.mxu_dtype = jnp.bfloat16 if precision == "bf16" else jnp.float32

    def __call__(self, guidance, inp):
        return guided_blur_pallas(guidance, inp, self.kernel_size, self.eps,
                                  self.border_type, self.subsample,
                                  mxu_dtype=self.mxu_dtype)


# ------------------------- pure-JAX reference (for checking) -----------------
def _ref_box_blur(x, ky, kx):
    py, px = ky // 2, kx // 2
    xp = jnp.pad(x, ((0, 0), (0, 0), (py, py), (px, px)), mode="reflect")
    out = jnp.zeros_like(x)
    H, W = x.shape[2], x.shape[3]
    for dy in range(ky):
        for dx in range(kx):
            out = out + xp[:, :, dy:dy + H, dx:dx + W]
    return out / float(ky * kx)


def _ref_guided_blur(g, p, k, eps):
    mean_I = _ref_box_blur(g, k, k)
    corr_I = _ref_box_blur(g * g, k, k)
    var_I = corr_I - mean_I * mean_I
    mean_p = _ref_box_blur(p, k, k)
    corr_Ip = _ref_box_blur(g * p, k, k)
    cov_Ip = corr_Ip - mean_I * mean_p
    a = cov_Ip / (var_I + eps)
    b = mean_p - a * mean_I
    mean_a = _ref_box_blur(a, k, k)
    mean_b = _ref_box_blur(b, k, k)
    return mean_a * g + mean_b


if __name__ == "__main__":
    key = jax.random.PRNGKey(0)
    kg, kp = jax.random.split(key)
    B, Cg, Ci, H, W = 2, 1, 4, 16, 16
    guidance = jax.random.uniform(kg, (B, Cg, H, W), dtype=jnp.float32)
    x = jax.random.uniform(kp, (B, Ci, H, W), dtype=jnp.float32)

    ref = _ref_guided_blur(guidance, x, 3, 0.1)

    # f32-MXU path: exact semantics check.
    out_f32 = GuidedBlur(kernel_size=3, eps=0.1, precision="f32")(guidance, x)
    out_f32 = jax.block_until_ready(out_f32)
    assert out_f32.shape == (B, Ci, H, W)
    np.testing.assert_allclose(np.asarray(out_f32), np.asarray(ref),
                               rtol=1e-4, atol=1e-4)

    # Default bf16-MXU path (f32 accumulate + f32 elementwise): looser check.
    out_bf16 = GuidedBlur(kernel_size=3, eps=0.1)(guidance, x)
    out_bf16 = jax.block_until_ready(out_bf16)
    assert out_bf16.shape == (B, Ci, H, W)
    np.testing.assert_allclose(np.asarray(out_bf16), np.asarray(ref),
                               rtol=5e-2, atol=5e-2)

    print("KERNEL_OK")
</pallas_src>

<mosaic_0001>
module attributes {stable_mosaic.version = 11 : i64} {
  func.func @_guided_blur_kernel(%arg0: i32, %arg1: i32, %arg2: memref<1x1x16x16xf32, #tpu.memory_space<vmem>>, %arg3: memref<1x1x16x16xf32, #tpu.memory_space<vmem>>, %arg4: memref<16x16xf32, #tpu.memory_space<vmem>>, %arg5: memref<16x16xf32, #tpu.memory_space<vmem>>, %arg6: memref<1x1x16x16xf32, #tpu.memory_space<vmem>>, %arg7: memref<16x16xf32, #tpu.memory_space<vmem>>, %arg8: memref<16x16xf32, #tpu.memory_space<vmem>>) attributes {dimension_semantics = [#tpu.dimension_semantics<parallel>, #tpu.dimension_semantics<arbitrary>], iteration_bounds = array<i64: 2, 4>, scalar_prefetch = 0 : i64, scratch_operands = 2 : i64, tpu.core_type = #tpu.core_type<tc>, window_params = [{transform_indices = @transform_0, window_bounds = array<i64: 1, 1, 16, 16>}, {transform_indices = @transform_1, window_bounds = array<i64: 1, 1, 16, 16>}, {pipeline_mode = #tpu.pipeline_mode<synchronous>, transform_indices = @transform_2, window_bounds = array<i64: 16, 16>}, {pipeline_mode = #tpu.pipeline_mode<synchronous>, transform_indices = @transform_3, window_bounds = array<i64: 16, 16>}, {transform_indices = @transform_4, window_bounds = array<i64: 1, 1, 16, 16>}]} {
    %c0 = arith.constant 0 : index
    %c0_0 = arith.constant 0 : index
    %0 = vector.load %arg4[%c0, %c0_0] : memref<16x16xf32, #tpu.memory_space<vmem>>, vector<16x16xf32>
    %c0_1 = arith.constant 0 : index
    %c0_2 = arith.constant 0 : index
    %1 = vector.load %arg5[%c0_1, %c0_2] : memref<16x16xf32, #tpu.memory_space<vmem>>, vector<16x16xf32>
    %c0_3 = arith.constant 0 : index
    %c0_4 = arith.constant 0 : index
    %c0_5 = arith.constant 0 : index
    %c0_6 = arith.constant 0 : index
    %2 = vector.load %arg2[%c0_3, %c0_4, %c0_5, %c0_6] : memref<1x1x16x16xf32, #tpu.memory_space<vmem>>, vector<1x1x16x16xf32>
    %3 = vector.shape_cast %2 : vector<1x1x16x16xf32> to vector<16x16xf32>
    %c0_i32 = arith.constant 0 : i32
    %4 = arith.cmpi eq, %arg1, %c0_i32 : i32
    %5 = arith.extui %4 : i1 to i32
    %c0_i32_7 = arith.constant 0 : i32
    %6 = arith.cmpi ne, %5, %c0_i32_7 : i32
    scf.if %6 {
      %38 = arith.mulf %3, %3 : vector<16x16xf32>
      %39 = tpu.concatenate %3, %38 in 0 : vector<16x16xf32>, vector<16x16xf32> -> vector<32x16xf32>
      %cst_23 = arith.constant dense<0.000000e+00> : vector<32x16xf32>
      %40 = tpu.matmul %39, %1, %cst_23 {dimension_numbers = #tpu.dot_dimension_numbers<[1], [0], [0], [1], [0, 0, 1, 1], [], []>} : vector<32x16xf32>, vector<16x16xf32>, vector<32x16xf32> -> vector<32x16xf32>
      %41 = vector.extract_strided_slice %40 {offsets = [0, 0], sizes = [16, 16], strides = [1, 1]} : vector<32x16xf32> to vector<16x16xf32>
      %42 = vector.extract_strided_slice %40 {offsets = [16, 0], sizes = [16, 16], strides = [1, 1]} : vector<32x16xf32> to vector<16x16xf32>
      %43 = tpu.concatenate %41, %42 in 1 : vector<16x16xf32>, vector<16x16xf32> -> vector<16x32xf32>
      %cst_24 = arith.constant dense<0.000000e+00> : vector<16x32xf32>
      %44 = tpu.matmul %0, %43, %cst_24 {dimension_numbers = #tpu.dot_dimension_numbers<[1], [0], [0], [1], [0, 0, 1, 1], [], []>} : vector<16x16xf32>, vector<16x32xf32>, vector<16x32xf32> -> vector<16x32xf32>
      %45 = vector.extract_strided_slice %44 {offsets = [0, 0], sizes = [16, 16], strides = [1, 1]} : vector<16x32xf32> to vector<16x16xf32>
      %46 = vector.extract_strided_slice %44 {offsets = [0, 16], sizes = [16, 16], strides = [1, 1]} : vector<16x32xf32> to vector<16x16xf32>
      %47 = arith.mulf %45, %45 : vector<16x16xf32>
      %48 = arith.subf %46, %47 : vector<16x16xf32>
      %c0_25 = arith.constant 0 : index
      %c0_26 = arith.constant 0 : index
      %49 = vector.load %arg7[%c0_25, %c0_26] : memref<16x16xf32, #tpu.memory_space<vmem>>, vector<16x16xf32>
      tpu.vector_store %arg7[%c0_25, %c0_26], %45 {strides = array<i32>} : memref<16x16xf32, #tpu.memory_space<vmem>>, vector<16x16xf32>,
      %cst_27 = arith.constant 1.000000e-01 : f32
      %50 = vector.broadcast %cst_27 : f32 to vector<16x16xf32>
      %51 = arith.addf %48, %50 : vector<16x16xf32>
      %52 = tpu.reciprocal %51 : vector<16x16xf32> -> vector<16x16xf32>
      %c0_28 = arith.constant 0 : index
      %c0_29 = arith.constant 0 : index
      %53 = vector.load %arg8[%c0_28, %c0_29] : memref<16x16xf32, #tpu.memory_space<vmem>>, vector<16x16xf32>
      tpu.vector_store %arg8[%c0_28, %c0_29], %52 {strides = array<i32>} : memref<16x16xf32, #tpu.memory_space<vmem>>, vector<16x16xf32>,
    } else {
    }
    %c0_8 = arith.constant 0 : index
    %c0_9 = arith.constant 0 : index
    %7 = vector.load %arg7[%c0_8, %c0_9] : memref<16x16xf32, #tpu.memory_space<vmem>>, vector<16x16xf32>
    %c0_10 = arith.constant 0 : index
    %c0_11 = arith.constant 0 : index
    %8 = vector.load %arg8[%c0_10, %c0_11] : memref<16x16xf32, #tpu.memory_space<vmem>>, vector<16x16xf32>
    %c0_12 = arith.constant 0 : index
    %c0_13 = arith.constant 0 : index
    %c0_14 = arith.constant 0 : index
    %c0_15 = arith.constant 0 : index
    %9 = vector.load %arg3[%c0_12, %c0_13, %c0_14, %c0_15] : memref<1x1x16x16xf32, #tpu.memory_space<vmem>>, vector<1x1x16x16xf32>
    %10 = vector.shape_cast %9 : vector<1x1x16x16xf32> to vector<16x16xf32>
    %11 = arith.mulf %3, %10 : vector<16x16xf32>
    %12 = tpu.concatenate %10, %11 in 0 : vector<16x16xf32>, vector<16x16xf32> -> vector<32x16xf32>
    %cst = arith.constant dense<0.000000e+00> : vector<32x16xf32>
    %13 = tpu.matmul %12, %1, %cst {dimension_numbers = #tpu.dot_dimension_numbers<[1], [0], [0], [1], [0, 0, 1, 1], [], []>} : vector<32x16xf32>, vector<16x16xf32>, vector<32x16xf32> -> vector<32x16xf32>
    %14 = vector.extract_strided_slice %13 {offsets = [0, 0], sizes = [16, 16], strides = [1, 1]} : vector<32x16xf32> to vector<16x16xf32>
    %15 = vector.extract_strided_slice %13 {offsets = [16, 0], sizes = [16, 16], strides = [1, 1]} : vector<32x16xf32> to vector<16x16xf32>
    %16 = tpu.concatenate %14, %15 in 1 : vector<16x16xf32>, vector<16x16xf32> -> vector<16x32xf32>
    %cst_16 = arith.constant dense<0.000000e+00> : vector<16x32xf32>
    %17 = tpu.matmul %0, %16, %cst_16 {dimension_numbers = #tpu.dot_dimension_numbers<[1], [0], [0], [1], [0, 0, 1, 1], [], []>} : vector<16x16xf32>, vector<16x32xf32>, vector<16x32xf32> -> vector<16x32xf32>
    %18 = vector.extract_strided_slice %17 {offsets = [0, 0], sizes = [16, 16], strides = [1, 1]} : vector<16x32xf32> to vector<16x16xf32>
    %19 = vector.extract_strided_slice %17 {offsets = [0, 16], sizes = [16, 16], strides = [1, 1]} : vector<16x32xf32> to vector<16x16xf32>
    %20 = arith.mulf %7, %18 : vector<16x16xf32>
    %21 = arith.subf %19, %20 : vector<16x16xf32>
    %22 = arith.mulf %21, %8 : vector<16x16xf32>
    %23 = arith.mulf %22, %7 : vector<16x16xf32>
    %24 = arith.subf %18, %23 : vector<16x16xf32>
    %25 = tpu.concatenate %22, %24 in 0 : vector<16x16xf32>, vector<16x16xf32> -> vector<32x16xf32>
    %cst_17 = arith.constant dense<0.000000e+00> : vector<32x16xf32>
    %26 = tpu.matmul %25, %1, %cst_17 {dimension_numbers = #tpu.dot_dimension_numbers<[1], [0], [0], [1], [0, 0, 1, 1], [], []>} : vector<32x16xf32>, vector<16x16xf32>, vector<32x16xf32> -> vector<32x16xf32>
    %27 = vector.extract_strided_slice %26 {offsets = [0, 0], sizes = [16, 16], strides = [1, 1]} : vector<32x16xf32> to vector<16x16xf32>
    %28 = vector.extract_strided_slice %26 {offsets = [16, 0], sizes = [16, 16], strides = [1, 1]} : vector<32x16xf32> to vector<16x16xf32>
    %29 = tpu.concatenate %27, %28 in 1 : vector<16x16xf32>, vector<16x16xf32> -> vector<16x32xf32>
    %cst_18 = arith.constant dense<0.000000e+00> : vector<16x32xf32>
    %30 = tpu.matmul %0, %29, %cst_18 {dimension_numbers = #tpu.dot_dimension_numbers<[1], [0], [0], [1], [0, 0, 1, 1], [], []>} : vector<16x16xf32>, vector<16x32xf32>, vector<16x32xf32> -> vector<16x32xf32>
    %31 = vector.extract_strided_slice %30 {offsets = [0, 0], sizes = [16, 16], strides = [1, 1]} : vector<16x32xf32> to vector<16x16xf32>
    %32 = vector.extract_strided_slice %30 {offsets = [0, 16], sizes = [16, 16], strides = [1, 1]} : vector<16x32xf32> to vector<16x16xf32>
    %33 = arith.mulf %31, %3 : vector<16x16xf32>
    %34 = arith.addf %33, %32 : vector<16x16xf32>
    %c0_19 = arith.constant 0 : index
    %c0_20 = arith.constant 0 : index
    %c0_21 = arith.constant 0 : index
    %c0_22 = arith.constant 0 : index
    %35 = vector.load %arg6[%c0_19, %c0_20, %c0_21, %c0_22] : memref<1x1x16x16xf32, #tpu.memory_space<vmem>>, vector<1x1x16x16xf32>
    %36 = vector.shape_cast %35 : vector<1x1x16x16xf32> to vector<16x16xf32>
    %37 = vector.shape_cast %34 : vector<16x16xf32> to vector<1x1x16x16xf32>
    tpu.vector_store %arg6[%c0_19, %c0_20, %c0_21, %c0_22], %37 {strides = array<i32>} : memref<1x1x16x16xf32, #tpu.memory_space<vmem>>, vector<1x1x16x16xf32>,
    return
  }
  func.func @transform_0(%arg0: i32, %arg1: i32) -> (i32, i32, i32, i32) {
    %c0_i32 = arith.constant 0 : i32
    %c0_i32_0 = arith.constant 0 : i32
    %c0_i32_1 = arith.constant 0 : i32
    %c0_i32_2 = arith.constant 0 : i32
    return %arg0, %c0_i32, %c0_i32_0, %c0_i32_1 : i32, i32, i32, i32
  }
  func.func @transform_1(%arg0: i32, %arg1: i32) -> (i32, i32, i32, i32) {
    %c0_i32 = arith.constant 0 : i32
    %c0_i32_0 = arith.constant 0 : i32
    %c0_i32_1 = arith.constant 0 : i32
    return %arg0, %arg1, %c0_i32, %c0_i32_0 : i32, i32, i32, i32
  }
  func.func @transform_2(%arg0: i32, %arg1: i32) -> (i32, i32) {
    %c0_i32 = arith.constant 0 : i32
    %c0_i32_0 = arith.constant 0 : i32
    %c0_i32_1 = arith.constant 0 : i32
    return %c0_i32, %c0_i32_0 : i32, i32
  }
  func.func @transform_3(%arg0: i32, %arg1: i32) -> (i32, i32) {
    %c0_i32 = arith.constant 0 : i32
    %c0_i32_0 = arith.constant 0 : i32
    %c0_i32_1 = arith.constant 0 : i32
    return %c0_i32, %c0_i32_0 : i32, i32
  }
  func.func @transform_4(%arg0: i32, %arg1: i32) -> (i32, i32, i32, i32) {
    %c0_i32 = arith.constant 0 : i32
    %c0_i32_0 = arith.constant 0 : i32
    %c0_i32_1 = arith.constant 0 : i32
    return %arg0, %arg1, %c0_i32, %c0_i32_0 : i32, i32, i32, i32
  }
}

</mosaic_0001>

<llo_original>
// kernel: tpu_custom_call.1
$region0: #{tpu_custom_call.1}
  #allocation0 [shape = 'u32[]', space=smem, size = 0x4, offset = 0x4, fixed_abs, tag = 'smem constant byte address 0x4 - core index']
  #allocation1 [shape = 'u32[144,128]{1,0:T(1,128)}', space=vmem, size = 0x12000, scoped, tag = 'internal scratch']
  #allocation2 [shape = 'f32[16,16]{1,0:T(8,128)}', space=vmem, size = 0x2000, scoped, tag = 'scratch operand']
  #allocation3 [shape = 'f32[16,16]{1,0:T(8,128)}', space=vmem, size = 0x2000, scoped, tag = 'scratch operand']
  %s0 = inlined_call_operand.hbm [shape: f32[2,1,16,16], index: 0, kind: input, shape index: {}]
  %s1 = inlined_call_operand.hbm [shape: f32[2,4,16,16], index: 1, kind: input, shape index: {}]
  %s2 = inlined_call_operand.hbm [shape: f32[16,16], index: 2, kind: input, shape index: {}]
  %s3 = inlined_call_operand.hbm [shape: f32[16,16], index: 3, kind: input, shape index: {}]
  %s4 = inlined_call_operand.hbm [shape: f32[2,4,16,16], index: 4, kind: output, shape index: {}]
  %s5 = sld [smem:[#allocation0]]
  $region69: #{tpu_custom_call.1} parent=0
    _
  %s7 = ssub.s32 1, %s5
  %s8 = scalar_select 0, %s7, %s5
  $region1: #{tpu_custom_call.1} parent=0
    #allocation4 [shape = 'u8[16384]{0}', space=vmem, size = 0x4000, scoped, tag = 'input window, operand 0']
    #allocation5 [shape = 's32[2]{0}', space=sflag, size = 0x8, scoped, tag = 'scoped memory for tpu_custom_call.1']
    #allocation6 [shape = 's32[2]{0}', space=sflag, size = 0x8, scoped, tag = 'scoped memory for tpu_custom_call.1']
    #allocation7 [shape = 'u8[16384]{0}', space=vmem, size = 0x4000, scoped, tag = 'input window, operand 1']
    #allocation8 [shape = 's32[2]{0}', space=sflag, size = 0x8, scoped, tag = 'scoped memory for tpu_custom_call.1']
    #allocation9 [shape = 'u8[8192]{0}', space=vmem, size = 0x2000, scoped, tag = 'input window, operand 2, single buffered']
    #allocation10 [shape = 'u8[8192]{0}', space=vmem, size = 0x2000, scoped, tag = 'input window, operand 3, single buffered']
    #allocation11 [shape = 's32[1]{0}', space=sflag, size = 0x4, scoped, tag = 'scoped memory for tpu_custom_call.1']
    #allocation12 [shape = 'u8[16384]{0}', space=vmem, size = 0x4000, scoped, tag = 'output window, operand 0']
    %9 = vsyncpa [#allocation5], 0
    %s10 = scalar_lea.sflag [#allocation5], 1
    %11 = vsyncpa %s10, 0
    %12 = vsyncpa [#allocation8], 0
    %s13 = scalar_lea.sflag [#allocation8], 1
    %14 = vsyncpa %s13, 0
    %15 = vsyncpa [#allocation11], 0
    %16 = vsyncpa [#allocation6], 0
    %s17 = scalar_lea.sflag [#allocation6], 1
    %18 = vsyncpa %s17, 0
    loop: start=0, step=1, limit=10
    $region2: #{tpu_custom_call.1} parent=1 // loop_pre_header
      _
    $region3: #{tpu_custom_call.1} parent=1 // loop_header
      %s20 = sphi 0, %s24
      %p21 = scmp.ge.s32.totalorder %s20, 10
      %s27 = sphi 0, %s39
      %s28 = sphi 0, %s35
      %s29 = sphi 0, %s27
      %s30 = sphi 0, %s28
      %s31 = sphi 0, %s29
      %s32 = sphi 0, %s30
      %s42 = sphi 0, %s44
      %s45 = sphi 0, %s42
      %s46 = sphi 0, %s45
      %s62 = sphi 0, %s46
      %s70 = sphi 0, %s72
      %s73 = sphi 0, %s70
      %s74 = sphi 0, %s73
      %s90 = sphi 0, %s74
      %s94 = sphi 0, %s94
      %s96 = sphi 0, %s94
      %s97 = sphi 0, %s96
      %s111 = sphi 0, %s97
      %s115 = sphi 0, %s115
      %s117 = sphi 0, %s115
      %s118 = sphi 0, %s117
      %s132 = sphi 0, %s118
      %s140 = sphi 0, %s142
      %s143 = sphi 0, %s140
      %s144 = sphi 0, %s143
      %s160 = sphi 0, %s144
    $region4: #{tpu_custom_call.1} parent=1 // loop_header_branch
      %23 = sbr.rel (%p21) target = $region8
    $region5: #{tpu_custom_call.1} parent=1 // loop_body
      %s25 = ssub.s32 %s20, 1
      %s26 = ssub.s32 %s20, 2
      %s33 = sadd.s32 1, %s28
      %p34 = scmp.ge.s32.totalorder %s33, 4
      %s35 = scalar_select %p34, 0, %s33
      %s36 = sadd.s32 1, %s27
      %s37 = scalar_select %p34, %s36, %s27
      %p38 = scmp.ge.s32.totalorder %s37, 2
      %s39 = scalar_select %p38, 0, %s37
      %s40 = ssub.s32 %s27, %s39
      %p41 = scmp.eq.s32.totalorder %s40, 0
      %s43 = sadd.s32 %s42, 1
      %s44 = scalar_select %p41, %s42, %s43
      %p47 = pneg %p41
      %p48 = scmp.eq.s32.totalorder %s20, 7
      %p49 = por %p47, %p48
      %p50 = scmp.ne.s32.totalorder %s42, %s45
      %p51 = scmp.eq.s32.totalorder %s20, 0
      %p52 = por %p50, %p51
      %p53 = scmp.ne.s32.totalorder %s42, %s45
      %p54 = scmp.eq.s32.totalorder %s25, 7
      %p55 = por %p53, %p54
      %p56 = scmp.ne.s32.totalorder %s45, %s46
      %p57 = scmp.eq.s32.totalorder %s25, 0
      %p58 = por %p56, %p57
      %p59 = scmp.ne.s32.totalorder %s45, %s46
      %p60 = scmp.eq.s32.totalorder %s26, 7
      %p61 = por %p59, %p60
      %p63 = scmp.ne.s32.totalorder %s46, %s62
      %p64 = scmp.eq.s32.totalorder %s26, 0
      %p65 = por %p63, %p64
      %s66 = ssub.s32 %s27, %s39
      %s67 = ssub.s32 %s28, %s35
      %s68 = sor.u32 %s66, %s67
      %p69 = scmp.eq.s32.totalorder %s68, 0
      %s71 = sadd.s32 %s70, 1
      %s72 = scalar_select %p69, %s70, %s71
      %p75 = pneg %p69
      %p76 = scmp.eq.s32.totalorder %s20, 7
      %p77 = por %p75, %p76
      %p78 = scmp.ne.s32.totalorder %s70, %s73
      %p79 = scmp.eq.s32.totalorder %s20, 0
      %p80 = por %p78, %p79
      %p81 = scmp.ne.s32.totalorder %s70, %s73
      %p82 = scmp.eq.s32.totalorder %s25, 7
      %p83 = por %p81, %p82
      %p84 = scmp.ne.s32.totalorder %s73, %s74
      %p85 = scmp.eq.s32.totalorder %s25, 0
      %p86 = por %p84, %p85
      %p87 = scmp.ne.s32.totalorder %s73, %s74
      %p88 = scmp.eq.s32.totalorder %s26, 7
      %p89 = por %p87, %p88
      %p91 = scmp.ne.s32.totalorder %s74, %s90
      %p92 = scmp.eq.s32.totalorder %s26, 0
      %p93 = por %p91, %p92
      %s95 = sadd.s32 %s94, 1
      %p98 = scmp.eq.s32.totalorder %s20, 7
      %p99 = scmp.ne.s32.totalorder %s94, %s96
      %p100 = scmp.eq.s32.totalorder %s20, 0
      %p101 = por %p99, %p100
      %p102 = scmp.ne.s32.totalorder %s94, %s96
      %p103 = scmp.eq.s32.totalorder %s25, 7
      %p104 = por %p102, %p103
      %p105 = scmp.ne.s32.totalorder %s96, %s97
      %p106 = scmp.eq.s32.totalorder %s25, 0
      %p107 = por %p105, %p106
      %p108 = scmp.ne.s32.totalorder %s96, %s97
      %p109 = scmp.eq.s32.totalorder %s26, 7
      %p110 = por %p108, %p109
      %p112 = scmp.ne.s32.totalorder %s97, %s111
      %p113 = scmp.eq.s32.totalorder %s26, 0
      %p114 = por %p112, %p113
      %s116 = sadd.s32 %s115, 1
      %p119 = scmp.eq.s32.totalorder %s20, 7
      %p120 = scmp.ne.s32.totalorder %s115, %s117
      %p121 = scmp.eq.s32.totalorder %s20, 0
      %p122 = por %p120, %p121
      %p123 = scmp.ne.s32.totalorder %s115, %s117
      %p124 = scmp.eq.s32.totalorder %s25, 7
      %p125 = por %p123, %p124
      %p126 = scmp.ne.s32.totalorder %s117, %s118
      %p127 = scmp.eq.s32.totalorder %s25, 0
      %p128 = por %p126, %p127
      %p129 = scmp.ne.s32.totalorder %s117, %s118
      %p130 = scmp.eq.s32.totalorder %s26, 7
      %p131 = por %p129, %p130
      %p133 = scmp.ne.s32.totalorder %s118, %s132
      %p134 = scmp.eq.s32.totalorder %s26, 0
      %p135 = por %p133, %p134
      %s136 = ssub.s32 %s27, %s39
      %s137 = ssub.s32 %s28, %s35
      %s138 = sor.u32 %s136, %s137
      %p139 = scmp.eq.s32.totalorder %s138, 0
      %s141 = sadd.s32 %s140, 1
      %s142 = scalar_select %p139, %s140, %s141
      %p145 = pneg %p139
      %p146 = scmp.eq.s32.totalorder %s20, 7
      %p147 = por %p145, %p146
      %p148 = scmp.ne.s32.totalorder %s140, %s143
      %p149 = scmp.eq.s32.totalorder %s20, 0
      %p150 = por %p148, %p149
      %p151 = scmp.ne.s32.totalorder %s140, %s143
      %p152 = scmp.eq.s32.totalorder %s25, 7
      %p153 = por %p151, %p152
      %p154 = scmp.ne.s32.totalorder %s143, %s144
      %p155 = scmp.eq.s32.totalorder %s25, 0
      %p156 = por %p154, %p155
      %p157 = scmp.ne.s32.totalorder %s143, %s144
      %p158 = scmp.eq.s32.totalorder %s26, 7
      %p159 = por %p157, %p158
      %p161 = scmp.ne.s32.totalorder %s144, %s160
      %p162 = scmp.eq.s32.totalorder %s26, 0
      %p163 = por %p161, %p162
      %p164 = scmp.le.s32.totalorder 1, %s20
      %p165 = scmp.lt.s32.totalorder %s20, 9
      %p166 = pnand %p164, %p165
      %p167 = pneg %p166
      // Predicated region
      $region9: #{tpu_custom_call.1} parent=5 // pred_check
        _
      $region10: #{tpu_custom_call.1} parent=5 // pred_check_branch
        %169 = sbr.rel (%p166) target = $region12
      $region11: #{tpu_custom_call.1} parent=5 // pred_region
        %s170 = ssub.s32 %s20, 1
        // Predicated region
        $region13: #{tpu_custom_call.1} parent=11 // pred_check
          %p171 = pneg %p107
        $region14: #{tpu_custom_call.1} parent=11 // pred_check_branch
          %173 = sbr.rel (%p171) target = $region16
        $region15: #{tpu_custom_call.1} parent=11 // pred_region
          %s175 = ssub.s32 256, 256
          %176 = vsyncadd [#allocation8], %s175
          %s177 = sshll.u32 [#allocation9], 4
          %s178 = int_to_ptr.vmem [resolvable:$true] %s177
          %183 = dma.hbm_to_vmem [thread:$0]  %s2, 256, %s178, [#allocation8], 128, 128, 8
        $region16: #{tpu_custom_call.1} parent=11 // pred_fallthru
          _
        // Predicated region
        $region17: #{tpu_custom_call.1} parent=11 // pred_check
          %p184 = pneg %p128
        $region18: #{tpu_custom_call.1} parent=11 // pred_check_branch
          %186 = sbr.rel (%p184) target = $region20
        $region19: #{tpu_custom_call.1} parent=11 // pred_region
          %s188 = ssub.s32 256, 256
          %189 = vsyncadd [#allocation11], %s188
          %s190 = sshll.u32 [#allocation10], 4
          %s191 = int_to_ptr.vmem [resolvable:$true] %s190
          %196 = dma.hbm_to_vmem [thread:$0]  %s3, 256, %s191, [#allocation11], 128, 128, 8
        $region20: #{tpu_custom_call.1} parent=11 // pred_fallthru
          _
      $region12: #{tpu_custom_call.1} parent=5 // pred_fallthru
        _
      %p197 = scmp.lt.s32.totalorder %s20, 8
      // Predicated region
      $region21: #{tpu_custom_call.1} parent=5 // pred_check
        %p198 = pneg %p197
      $region22: #{tpu_custom_call.1} parent=5 // pred_check_branch
        %200 = sbr.rel (%p198) target = $region24
      $region23: #{tpu_custom_call.1} parent=5 // pred_region
        // Predicated region
        $region25: #{tpu_custom_call.1} parent=23 // pred_check
          %p201 = pneg %p52
        $region26: #{tpu_custom_call.1} parent=23 // pred_check_branch
          %203 = sbr.rel (%p201) target = $region28
        $region27: #{tpu_custom_call.1} parent=23 // pred_region
          %s204 = sand.u32 %s42, 1
          %s205 = scalar_lea.sflag [#allocation5], %s204
          %s206 = sand.u32 %s42, 1
          %s207 = smul.addr %s206, 16
          %s208 = scalar_lea.vmem [#allocation4], %s207
          %s210 = ssub.s32 256, 256
          %211 = vsyncadd %s205, %s210
          %s212 = smul.addr %s27, 2
          %s213 = smul.addr %s212, 128
          %s214 = scalar_lea.hbm %s0, %s213
          %s215 = sshll.u32 %s208, 4
          %s216 = int_to_ptr.vmem [resolvable:$true] %s215
          %221 = dma.hbm_to_vmem [thread:$0]  %s214, 256, %s216, %s205, 128, 128, 8
        $region28: #{tpu_custom_call.1} parent=23 // pred_fallthru
          _
        // Predicated region
        $region29: #{tpu_custom_call.1} parent=23 // pred_check
          %p222 = pneg %p80
        $region30: #{tpu_custom_call.1} parent=23 // pred_check_branch
          %224 = sbr.rel (%p222) target = $region32
        $region31: #{tpu_custom_call.1} parent=23 // pred_region
          %s225 = sand.u32 %s20, 1
          %s226 = scalar_lea.sflag [#allocation8], %s225
          %s227 = sand.u32 %s70, 1
          %s228 = smul.addr %s227, 16
          %s229 = scalar_lea.vmem [#allocation7], %s228
          %s231 = ssub.s32 256, 256
          %232 = vsyncadd %s226, %s231
          %s233 = smul.addr %s28, 2
          %s234 = smul.addr %s27, 8
          %s235 = sadd.s32 %s233, %s234
          %s236 = smul.addr %s235, 128
          %s237 = scalar_lea.hbm %s1, %s236
          %s238 = sshll.u32 %s229, 4
          %s239 = int_to_ptr.vmem [resolvable:$true] %s238
          %244 = dma.hbm_to_vmem [thread:$0]  %s237, 256, %s239, %s226, 128, 128, 8
        $region32: #{tpu_custom_call.1} parent=23 // pred_fallthru
          _
      $region24: #{tpu_custom_call.1} parent=5 // pred_fallthru
        _
      %p245 = scmp.le.s32.totalorder 1, %s20
      %p246 = scmp.lt.s32.totalorder %s20, 9
      %p247 = pnand %p245, %p246
      %p248 = pneg %p247
      // Predicated region
      $region33: #{tpu_custom_call.1} parent=5 // pred_check
        _
      $region34: #{tpu_custom_call.1} parent=5 // pred_check_branch
        %250 = sbr.rel (%p247) target = $region36
      $region35: #{tpu_custom_call.1} parent=5 // pred_region
        %s251 = ssub.s32 %s20, 1
        %s252 = sand.u32 %s45, 1
        %s253 = scalar_lea.sflag [#allocation5], %s252
        %s254 = sand.u32 %s45, 1
        %s255 = smul.addr %s254, 16
        %s256 = scalar_lea.vmem [#allocation4], %s255
        // Predicated region
        $region37: #{tpu_custom_call.1} parent=35 // pred_check
          %p257 = pneg %p58
        $region38: #{tpu_custom_call.1} parent=35 // pred_check_branch
          %259 = sbr.rel (%p257) target = $region40
        $region39: #{tpu_custom_call.1} parent=35 // pred_region
          %260 = dma.done %s253, 256
        $region40: #{tpu_custom_call.1} parent=35 // pred_fallthru
          _
        %s261 = sand.u32 %s25, 1
        %s262 = scalar_lea.sflag [#allocation8], %s261
        %s263 = sand.u32 %s73, 1
        %s264 = smul.addr %s263, 16
        %s265 = scalar_lea.vmem [#allocation7], %s264
        // Predicated region
        $region41: #{tpu_custom_call.1} parent=35 // pred_check
          %p266 = pneg %p86
        $region42: #{tpu_custom_call.1} parent=35 // pred_check_branch
          %268 = sbr.rel (%p266) target = $region44
        $region43: #{tpu_custom_call.1} parent=35 // pred_region
          %269 = dma.done %s262, 256
        $region44: #{tpu_custom_call.1} parent=35 // pred_fallthru
          _
        // Predicated region
        $region45: #{tpu_custom_call.1} parent=35 // pred_check
          %p270 = pneg %p107
        $region46: #{tpu_custom_call.1} parent=35 // pred_check_branch
          %272 = sbr.rel (%p270) target = $region48
        $region47: #{tpu_custom_call.1} parent=35 // pred_region
          %273 = dma.done [#allocation8], 256
        $region48: #{tpu_custom_call.1} parent=35 // pred_fallthru
          _
        // Predicated region
        $region49: #{tpu_custom_call.1} parent=35 // pred_check
          %p274 = pneg %p128
        $region50: #{tpu_custom_call.1} parent=35 // pred_check_branch
          %276 = sbr.rel (%p274) target = $region52
        $region51: #{tpu_custom_call.1} parent=35 // pred_region
          %277 = dma.done [#allocation11], 256
        $region52: #{tpu_custom_call.1} parent=35 // pred_fallthru
          _
        %s278 = sand.u32 %s45, 1
        %s279 = scalar_lea.sflag [#allocation5], %s278
        %s280 = sand.u32 %s45, 1
        %s281 = smul.addr %s280, 16
        %s282 = scalar_lea.vmem [#allocation4], %s281
        %p283 = pneg %p58
        %p284 = pneg %p55
        %s285 = sand.u32 %s25, 1
        %s286 = scalar_lea.sflag [#allocation8], %s285
        %s287 = sand.u32 %s73, 1
        %s288 = smul.addr %s287, 16
        %s289 = scalar_lea.vmem [#allocation7], %s288
        %p290 = pneg %p86
        %p291 = pneg %p83
        %p292 = pneg %p107
        %p293 = pneg %p104
        %p294 = pneg %p128
        %p295 = pneg %p125
        %p296 = pneg %p156
        %p297 = pneg %p153
        %s298 = sand.u32 %s143, 1
        %s299 = scalar_lea.sflag [#allocation6], %s298
        %s300 = sand.u32 %s143, 1
        %s301 = smul.addr %s300, 16
        %s302 = scalar_lea.vmem [#allocation12], %s301
        %v303 = vld [vmem:[#allocation9] sm:$0xff]
        %v304 = vld [vmem:[#allocation9 + $0x8] sm:$0xff]
        %v305 = vld [vmem:[#allocation10] sm:$0xff]
        %v306 = vld [vmem:[#allocation10 + $0x8] sm:$0xff]
        %v307 = vld [vmem:[%s256] sm:$0xff]
        %v308 = vld [vmem:[%s256 + $0x8] sm:$0xff]
        %p309 = scmp.eq.s32.totalorder %s30, 0
        // Predicated region
        $region53: #{tpu_custom_call.1} parent=35 // pred_check
          %p310 = pneg %p309
        $region54: #{tpu_custom_call.1} parent=35 // pred_check_branch
          %312 = sbr.rel (%p310) target = $region56
        $region55: #{tpu_custom_call.1} parent=35 // pred_region
          %v313 = vmul.f32 %v307, %v307
          %v314 = vmul.f32 %v308, %v308
          %vm315 = vcmask 130048
          %v317 = vsel %vm315, %v307, 0
          %v320 = vsel %vm315, %v308, 0
          %v323 = vsel %vm315, %v313, 0
          %v326 = vsel %vm315, %v314, 0
          %328 = vmatprep.subr.mxu0 0.0
          %329 = vmatpush1.msra.mxu0 %v305
          %330 = vmatprep.subr.mxu0 0.0
          %331 = vmatpush1.msra.mxu0 %v306
          %332 = vmatprep.subr.mxu0 0.0
          %333 = vmatpush1.msra.mxu0 0.0
          %334 = vmatprep.subr.mxu0 0.0
          %335 = vmatpush1.msra.mxu0 0.0
          %336 = vmatprep.subr.mxu0 0.0
          %337 = vmatpush1.msra.mxu0 0.0
          %338 = vmatprep.subr.mxu0 0.0
          %339 = vmatpush1.msra.mxu0 0.0
          %340 = vmatprep.subr.mxu0 0.0
          %341 = vmatpush1.msra.mxu0 0.0
          %342 = vmatprep.subr.mxu0 0.0
          %343 = vmatpush1.msra.mxu0 0.0
          %344 = vmatprep.subr.mxu0 0.0
          %345 = vmatpush1.msra.mxu0 0.0
          %346 = vmatprep.subr.mxu0 0.0
          %347 = vmatpush1.msra.mxu0 0.0
          %348 = vmatprep.subr.mxu0 0.0
          %349 = vmatpush1.msra.mxu0 0.0
          %350 = vmatprep.subr.mxu0 0.0
          %351 = vmatpush1.msra.mxu0 0.0
          %352 = vmatprep.subr.mxu0 0.0
          %353 = vmatpush1.msra.mxu0 0.0
          %354 = vmatprep.subr.mxu0 0.0
          %355 = vmatpush1.msra.mxu0 0.0
          %356 = vmatprep.subr.mxu0 0.0
          %357 = vmatpush1.msra.mxu0 0.0
          %358 = vmatprep.subr.mxu0 0.0
          %359 = vmatpush1.msra.mxu0 0.0
          %360 = vmatprep.subr.mxu0 0.0
          %361 = vmatpush1.msra.mxu0 0.0
          %362 = vmatprep.subr.mxu0 0.0
          %363 = vmatpush1.msra.mxu0 0.0
          %364 = vmatprep.subr.mxu0 0.0
          %365 = vmatpush1.msra.mxu0 0.0
          %366 = vmatprep.subr.mxu0 0.0
          %367 = vmatpush1.msra.mxu0 0.0
          %368 = vmatprep.subr.mxu0 0.0
          %369 = vmatpush1.msra.mxu0 0.0
          %370 = vmatprep.subr.mxu0 0.0
          %371 = vmatpush1.msra.mxu0 0.0
          %372 = vmatprep.subr.mxu0 0.0
          %373 = vmatpush1.msra.mxu0 0.0
          %374 = vmatprep.subr.mxu0 0.0
          %375 = vmatpush1.msra.mxu0 0.0
          %376 = vmatprep.subr.mxu0 0.0
          %377 = vmatpush1.msra.mxu0 0.0
          %378 = vmatprep.subr.mxu0 0.0
          %379 = vmatpush1.msra.mxu0 0.0
          %380 = vmatprep.subr.mxu0 0.0
          %381 = vmatpush1.msra.mxu0 0.0
          %382 = vmatprep.subr.mxu0 0.0
          %383 = vmatpush1.msra.mxu0 0.0
          %384 = vmatprep.subr.mxu0 0.0
          %385 = vmatpush1.msra.mxu0 0.0
          %386 = vmatprep.subr.mxu0 0.0
          %387 = vmatpush1.msra.mxu0 0.0
          %388 = vmatprep.subr.mxu0 0.0
          %389 = vmatpush1.msra.mxu0 0.0
          %390 = vmatprep.subr.mxu0 0.0
          %391 = vmatpush1.msra.mxu0 0.0
          %392 = vmatprep.mubr.f32.mxu0 0.0
          %393 = vmatmul.mubr.f32.gmra.mrb[0].mxu0 %v317
          %v394 = vpop.f32.mrb[0].mxu0
          %v395 = vadd.f32 0.0, %v394
          %v396 = vpop.f32.mrb[0].mxu0
          %397 = vmatprep.mubr.f32.mxu0 0.0
          %398 = vmatmul.mubr.f32.gmra.mrb[0].mxu0 %v320
          %v399 = vpop.f32.mrb[0].mxu0
          %v400 = vadd.f32 0.0, %v399
          %v401 = vpop.f32.mrb[0].mxu0
          %402 = vmatprep.mubr.f32.mxu0 0.0
          %403 = vmatmul.mubr.f32.gmra.mrb[0].mxu0 %v323
          %v404 = vpop.f32.mrb[0].mxu0
          %v405 = vadd.f32 0.0, %v404
          %v406 = vpop.f32.mrb[0].mxu0
          %407 = vmatprep.mubr.f32.mxu0 0.0
          %408 = vmatmul.mubr.f32.gmra.mrb[0].mxu0 %v326
          %v409 = vpop.f32.mrb[0].mxu0
          %v410 = vadd.f32 0.0, %v409
          %v411 = vpop.f32.mrb[0].mxu0
          %412 = vdwg.mxu0
          %415 = vrot.lane.b32.xlu0 %v405, 16
          %v416 = vpop.permute.xlu0 %415
          %417 = vrot.lane.b32.xlu0 %v410, 16
          %v418 = vpop.permute.xlu0 %417
          %v421 = vsel %vm315, %v395, %v416
          %v422 = vsel %vm315, %v400, %v418
          %v424 = vsel %vm315, %v303, 0
          %v427 = vsel %vm315, %v304, 0
          %429 = vmatprep.subr.mxu0 0.0
          %430 = vmatpush1.msra.mxu0 %v421
          %431 = vmatprep.subr.mxu0 0.0
          %432 = vmatpush1.msra.mxu0 %v422
          %433 = vmatprep.subr.mxu0 0.0
          %434 = vmatpush1.msra.mxu0 0.0
          %435 = vmatprep.subr.mxu0 0.0
          %436 = vmatpush1.msra.mxu0 0.0
          %437 = vmatprep.subr.mxu0 0.0
          %438 = vmatpush1.msra.mxu0 0.0
          %439 = vmatprep.subr.mxu0 0.0
          %440 = vmatpush1.msra.mxu0 0.0
          %441 = vmatprep.subr.mxu0 0.0
          %442 = vmatpush1.msra.mxu0 0.0
          %443 = vmatprep.subr.mxu0 0.0
          %444 = vmatpush1.msra.mxu0 0.0
          %445 = vmatprep.subr.mxu0 0.0
          %446 = vmatpush1.msra.mxu0 0.0
          %447 = vmatprep.subr.mxu0 0.0
          %448 = vmatpush1.msra.mxu0 0.0
          %449 = vmatprep.subr.mxu0 0.0
          %450 = vmatpush1.msra.mxu0 0.0
          %451 = vmatprep.subr.mxu0 0.0
          %452 = vmatpush1.msra.mxu0 0.0
          %453 = vmatprep.subr.mxu0 0.0
          %454 = vmatpush1.msra.mxu0 0.0
          %455 = vmatprep.subr.mxu0 0.0
          %456 = vmatpush1.msra.mxu0 0.0
          %457 = vmatprep.subr.mxu0 0.0
          %458 = vmatpush1.msra.mxu0 0.0
          %459 = vmatprep.subr.mxu0 0.0
          %460 = vmatpush1.msra.mxu0 0.0
          %461 = vmatprep.subr.mxu0 0.0
          %462 = vmatpush1.msra.mxu0 0.0
          %463 = vmatprep.subr.mxu0 0.0
          %464 = vmatpush1.msra.mxu0 0.0
          %465 = vmatprep.subr.mxu0 0.0
          %466 = vmatpush1.msra.mxu0 0.0
          %467 = vmatprep.subr.mxu0 0.0
          %468 = vmatpush1.msra.mxu0 0.0
          %469 = vmatprep.subr.mxu0 0.0
          %470 = vmatpush1.msra.mxu0 0.0
          %471 = vmatprep.subr.mxu0 0.0
          %472 = vmatpush1.msra.mxu0 0.0
          %473 = vmatprep.subr.mxu0 0.0
          %474 = vmatpush1.msra.mxu0 0.0
          %475 = vmatprep.subr.mxu0 0.0
          %476 = vmatpush1.msra.mxu0 0.0
          %477 = vmatprep.subr.mxu0 0.0
          %478 = vmatpush1.msra.mxu0 0.0
          %479 = vmatprep.subr.mxu0 0.0
          %480 = vmatpush1.msra.mxu0 0.0
          %481 = vmatprep.subr.mxu0 0.0
          %482 = vmatpush1.msra.mxu0 0.0
          %483 = vmatprep.subr.mxu0 0.0
          %484 = vmatpush1.msra.mxu0 0.0
          %485 = vmatprep.subr.mxu0 0.0
          %486 = vmatpush1.msra.mxu0 0.0
          %487 = vmatprep.subr.mxu0 0.0
          %488 = vmatpush1.msra.mxu0 0.0
          %489 = vmatprep.subr.mxu0 0.0
          %490 = vmatpush1.msra.mxu0 0.0
          %491 = vmatprep.subr.mxu0 0.0
          %492 = vmatpush1.msra.mxu0 0.0
          %493 = vmatprep.mubr.f32.mxu0 0.0
          %494 = vmatmul.mubr.f32.gmra.mrb[0].mxu0 %v424
          %v495 = vpop.f32.mrb[0].mxu0
          %v496 = vadd.f32 0.0, %v495
          %v497 = vpop.f32.mrb[0].mxu0
          %498 = vmatprep.mubr.f32.mxu0 0.0
          %499 = vmatmul.mubr.f32.gmra.mrb[0].mxu0 %v427
          %v500 = vpop.f32.mrb[0].mxu0
          %v501 = vadd.f32 0.0, %v500
          %v502 = vpop.f32.mrb[0].mxu0
          %503 = vdwg.mxu0
          %v504 = vmul.f32 %v496, %v496
          %v505 = vmul.f32 %v501, %v501
          %508 = vrot.lane.b32.xlu0 %v504, 16
          %v509 = vpop.permute.xlu0 %508
          %510 = vrot.lane.b32.xlu0 %v505, 16
          %v511 = vpop.permute.xlu0 %510
          %v514 = vsub.f32 %v496, %v509
          %v515 = vsub.f32 %v501, %v511
          %516 = vst.msk [vmem:[#allocation2] sm:$0xff] %vm315, %v496
          %517 = vst.msk [vmem:[#allocation2 + $0x8] sm:$0xff] %vm315, %v501
          %v518 = vadd.f32 %v514, 0.1
          %v519 = vadd.f32 %v515, 0.1
          %v520 = vrcp.pop %v518
          %v521 = vrcp.pop %v519
          %524 = vrot.lane.b32.xlu0 %v520, 112
          %v525 = vpop.permute.xlu0 %524
          %526 = vrot.lane.b32.xlu0 %v521, 112
          %v527 = vpop.permute.xlu0 %526
          %530 = vst.msk [vmem:[#allocation3] sm:$0xff] %vm315, %v525
          %531 = vst.msk [vmem:[#allocation3 + $0x8] sm:$0xff] %vm315, %v527
        $region56: #{tpu_custom_call.1} parent=35 // pred_fallthru
          _
        %v532 = vld [vmem:[#allocation2] sm:$0xff]
        %v533 = vld [vmem:[#allocation2 + $0x8] sm:$0xff]
        %v534 = vld [vmem:[#allocation3] sm:$0xff]
        %v535 = vld [vmem:[#allocation3 + $0x8] sm:$0xff]
        %v536 = vld [vmem:[%s265] sm:$0xff]
        %v537 = vld [vmem:[%s265 + $0x8] sm:$0xff]
        %v538 = vmul.f32 %v307, %v536
        %v539 = vmul.f32 %v308, %v537
        %vm540 = vcmask 130048
        %v542 = vsel %vm540, %v536, 0
        %v545 = vsel %vm540, %v537, 0
        %v548 = vsel %vm540, %v538, 0
        %v551 = vsel %vm540, %v539, 0
        %553 = vmatprep.subr.mxu0 0.0
        %554 = vmatpush1.msra.mxu0 %v305
        %555 = vmatprep.subr.mxu0 0.0
        %556 = vmatpush1.msra.mxu0 %v306
        %557 = vmatprep.subr.mxu0 0.0
        %558 = vmatpush1.msra.mxu0 0.0
        %559 = vmatprep.subr.mxu0 0.0
        %560 = vmatpush1.msra.mxu0 0.0
        %561 = vmatprep.subr.mxu0 0.0
        %562 = vmatpush1.msra.mxu0 0.0
        %563 = vmatprep.subr.mxu0 0.0
        %564 = vmatpush1.msra.mxu0 0.0
        %565 = vmatprep.subr.mxu0 0.0
        %566 = vmatpush1.msra.mxu0 0.0
        %567 = vmatprep.subr.mxu0 0.0
        %568 = vmatpush1.msra.mxu0 0.0
        %569 = vmatprep.subr.mxu0 0.0
        %570 = vmatpush1.msra.mxu0 0.0
        %571 = vmatprep.subr.mxu0 0.0
        %572 = vmatpush1.msra.mxu0 0.0
        %573 = vmatprep.subr.mxu0 0.0
        %574 = vmatpush1.msra.mxu0 0.0
        %575 = vmatprep.subr.mxu0 0.0
        %576 = vmatpush1.msra.mxu0 0.0
        %577 = vmatprep.subr.mxu0 0.0
        %578 = vmatpush1.msra.mxu0 0.0
        %579 = vmatprep.subr.mxu0 0.0
        %580 = vmatpush1.msra.mxu0 0.0
        %581 = vmatprep.subr.mxu0 0.0
        %582 = vmatpush1.msra.mxu0 0.0
        %583 = vmatprep.subr.mxu0 0.0
        %584 = vmatpush1.msra.mxu0 0.0
        %585 = vmatprep.subr.mxu0 0.0
        %586 = vmatpush1.msra.mxu0 0.0
        %587 = vmatprep.subr.mxu0 0.0
        %588 = vmatpush1.msra.mxu0 0.0
        %589 = vmatprep.subr.mxu0 0.0
        %590 = vmatpush1.msra.mxu0 0.0
        %591 = vmatprep.subr.mxu0 0.0
        %592 = vmatpush1.msra.mxu0 0.0
        %593 = vmatprep.subr.mxu0 0.0
        %594 = vmatpush1.msra.mxu0 0.0
        %595 = vmatprep.subr.mxu0 0.0
        %596 = vmatpush1.msra.mxu0 0.0
        %597 = vmatprep.subr.mxu0 0.0
        %598 = vmatpush1.msra.mxu0 0.0
        %599 = vmatprep.subr.mxu0 0.0
        %600 = vmatpush1.msra.mxu0 0.0
        %601 = vmatprep.subr.mxu0 0.0
        %602 = vmatpush1.msra.mxu0 0.0
        %603 = vmatprep.subr.mxu0 0.0
        %604 = vmatpush1.msra.mxu0 0.0
        %605 = vmatprep.subr.mxu0 0.0
        %606 = vmatpush1.msra.mxu0 0.0
        %607 = vmatprep.subr.mxu0 0.0
        %608 = vmatpush1.msra.mxu0 0.0
        %609 = vmatprep.subr.mxu0 0.0
        %610 = vmatpush1.msra.mxu0 0.0
        %611 = vmatprep.subr.mxu0 0.0
        %612 = vmatpush1.msra.mxu0 0.0
        %613 = vmatprep.subr.mxu0 0.0
        %614 = vmatpush1.msra.mxu0 0.0
        %615 = vmatprep.subr.mxu0 0.0
        %616 = vmatpush1.msra.mxu0 0.0
        %617 = vmatprep.mubr.f32.mxu0 0.0
        %618 = vmatmul.mubr.f32.gmra.mrb[0].mxu0 %v542
        %v619 = vpop.f32.mrb[0].mxu0
        %v620 = vadd.f32 0.0, %v619
        %v621 = vpop.f32.mrb[0].mxu0
        %622 = vmatprep.mubr.f32.mxu0 0.0
        %623 = vmatmul.mubr.f32.gmra.mrb[0].mxu0 %v545
        %v624 = vpop.f32.mrb[0].mxu0
        %v625 = vadd.f32 0.0, %v624
        %v626 = vpop.f32.mrb[0].mxu0
        %627 = vmatprep.mubr.f32.mxu0 0.0
        %628 = vmatmul.mubr.f32.gmra.mrb[0].mxu0 %v548
        %v629 = vpop.f32.mrb[0].mxu0
        %v630 = vadd.f32 0.0, %v629
        %v631 = vpop.f32.mrb[0].mxu0
        %632 = vmatprep.mubr.f32.mxu0 0.0
        %633 = vmatmul.mubr.f32.gmra.mrb[0].mxu0 %v551
        %v634 = vpop.f32.mrb[0].mxu0
        %v635 = vadd.f32 0.0, %v634
        %v636 = vpop.f32.mrb[0].mxu0
        %637 = vdwg.mxu0
        %640 = vrot.lane.b32.xlu0 %v630, 16
        %v641 = vpop.permute.xlu0 %640
        %642 = vrot.lane.b32.xlu0 %v635, 16
        %v643 = vpop.permute.xlu0 %642
        %v646 = vsel %vm540, %v620, %v641
        %v647 = vsel %vm540, %v625, %v643
        %v649 = vsel %vm540, %v303, 0
        %v652 = vsel %vm540, %v304, 0
        %654 = vmatprep.subr.mxu0 0.0
        %655 = vmatpush1.msra.mxu0 %v646
        %656 = vmatprep.subr.mxu0 0.0
        %657 = vmatpush1.msra.mxu0 %v647
        %658 = vmatprep.subr.mxu0 0.0
        %659 = vmatpush1.msra.mxu0 0.0
        %660 = vmatprep.subr.mxu0 0.0
        %661 = vmatpush1.msra.mxu0 0.0
        %662 = vmatprep.subr.mxu0 0.0
        %663 = vmatpush1.msra.mxu0 0.0
        %664 = vmatprep.subr.mxu0 0.0
        %665 = vmatpush1.msra.mxu0 0.0
        %666 = vmatprep.subr.mxu0 0.0
        %667 = vmatpush1.msra.mxu0 0.0
        %668 = vmatprep.subr.mxu0 0.0
        %669 = vmatpush1.msra.mxu0 0.0
        %670 = vmatprep.subr.mxu0 0.0
        %671 = vmatpush1.msra.mxu0 0.0
        %672 = vmatprep.subr.mxu0 0.0
        %673 = vmatpush1.msra.mxu0 0.0
        %674 = vmatprep.subr.mxu0 0.0
        %675 = vmatpush1.msra.mxu0 0.0
        %676 = vmatprep.subr.mxu0 0.0
        %677 = vmatpush1.msra.mxu0 0.0
        %678 = vmatprep.subr.mxu0 0.0
        %679 = vmatpush1.msra.mxu0 0.0
        %680 = vmatprep.subr.mxu0 0.0
        %681 = vmatpush1.msra.mxu0 0.0
        %682 = vmatprep.subr.mxu0 0.0
        %683 = vmatpush1.msra.mxu0 0.0
        %684 = vmatprep.subr.mxu0 0.0
        %685 = vmatpush1.msra.mxu0 0.0
        %686 = vmatprep.subr.mxu0 0.0
        %687 = vmatpush1.msra.mxu0 0.0
        %688 = vmatprep.subr.mxu0 0.0
        %689 = vmatpush1.msra.mxu0 0.0
        %690 = vmatprep.subr.mxu0 0.0
        %691 = vmatpush1.msra.mxu0 0.0
        %692 = vmatprep.subr.mxu0 0.0
        %693 = vmatpush1.msra.mxu0 0.0
        %694 = vmatprep.subr.mxu0 0.0
        %695 = vmatpush1.msra.mxu0 0.0
        %696 = vmatprep.subr.mxu0 0.0
        %697 = vmatpush1.msra.mxu0 0.0
        %698 = vmatprep.subr.mxu0 0.0
        %699 = vmatpush1.msra.mxu0 0.0
        %700 = vmatprep.subr.mxu0 0.0
        %701 = vmatpush1.msra.mxu0 0.0
        %702 = vmatprep.subr.mxu0 0.0
        %703 = vmatpush1.msra.mxu0 0.0
        %704 = vmatprep.subr.mxu0 0.0
        %705 = vmatpush1.msra.mxu0 0.0
        %706 = vmatprep.subr.mxu0 0.0
        %707 = vmatpush1.msra.mxu0 0.0
        %708 = vmatprep.subr.mxu0 0.0
        %709 = vmatpush1.msra.mxu0 0.0
        %710 = vmatprep.subr.mxu0 0.0
        %711 = vmatpush1.msra.mxu0 0.0
        %712 = vmatprep.subr.mxu0 0.0
        %713 = vmatpush1.msra.mxu0 0.0
        %714 = vmatprep.subr.mxu0 0.0
        %715 = vmatpush1.msra.mxu0 0.0
        %716 = vmatprep.subr.mxu0 0.0
        %717 = vmatpush1.msra.mxu0 0.0
        %718 = vmatprep.mubr.f32.mxu0 0.0
        %719 = vmatmul.mubr.f32.gmra.mrb[0].mxu0 %v649
        %v720 = vpop.f32.mrb[0].mxu0
        %v721 = vadd.f32 0.0, %v720
        %v722 = vpop.f32.mrb[0].mxu0
        %723 = vmatprep.mubr.f32.mxu0 0.0
        %724 = vmatmul.mubr.f32.gmra.mrb[0].mxu0 %v652
        %v725 = vpop.f32.mrb[0].mxu0
        %v726 = vadd.f32 0.0, %v725
        %v727 = vpop.f32.mrb[0].mxu0
        %728 = vdwg.mxu0
        %v729 = vmul.f32 %v532, %v721
        %v730 = vmul.f32 %v533, %v726
        %733 = vrot.lane.b32.xlu0 %v729, 16
        %v734 = vpop.permute.xlu0 %733
        %735 = vrot.lane.b32.xlu0 %v730, 16
        %v736 = vpop.permute.xlu0 %735
        %v739 = vsub.f32 %v721, %v734
        %v740 = vsub.f32 %v726, %v736
        %743 = vrot.lane.b32.xlu0 %v534, 16
        %v744 = vpop.permute.xlu0 %743
        %745 = vrot.lane.b32.xlu0 %v535, 16
        %v746 = vpop.permute.xlu0 %745
        %v749 = vmul.f32 %v739, %v744
        %v750 = vmul.f32 %v740, %v746
        %753 = vrot.lane.b32.xlu0 %v532, 16
        %v754 = vpop.permute.xlu0 %753
        %755 = vrot.lane.b32.xlu0 %v533, 16
        %v756 = vpop.permute.xlu0 %755
        %v759 = vmul.f32 %v749, %v754
        %v760 = vmul.f32 %v750, %v756
        %763 = vrot.lane.b32.xlu0 %v759, 112
        %v764 = vpop.permute.xlu0 %763
        %765 = vrot.lane.b32.xlu0 %v760, 112
        %v766 = vpop.permute.xlu0 %765
        %v769 = vsub.f32 %v721, %v764
        %v770 = vsub.f32 %v726, %v766
        %773 = vrot.lane.b32.xlu0 %v769, 16
        %v774 = vpop.permute.xlu0 %773
        %775 = vrot.lane.b32.xlu0 %v770, 16
        %v776 = vpop.permute.xlu0 %775
        %779 = vrot.lane.b32.xlu0 %v749, 112
        %v780 = vpop.permute.xlu0 %779
        %781 = vrot.lane.b32.xlu0 %v750, 112
        %v782 = vpop.permute.xlu0 %781
        %783 = vrot.lane.b32.xlu0 %v774, 112
        %v784 = vpop.permute.xlu0 %783
        %785 = vrot.lane.b32.xlu0 %v776, 112
        %v786 = vpop.permute.xlu0 %785
        %v787 = vsel %vm540, %v780, 0
        %v789 = vsel %vm540, %v782, 0
        %v791 = vsel %vm540, %v784, 0
        %v793 = vsel %vm540, %v786, 0
        %795 = vmatprep.subr.mxu0 0.0
        %796 = vmatpush1.msra.mxu0 %v305
        %797 = vmatprep.subr.mxu0 0.0
        %798 = vmatpush1.msra.mxu0 %v306
        %799 = vmatprep.subr.mxu0 0.0
        %800 = vmatpush1.msra.mxu0 0.0
        %801 = vmatprep.subr.mxu0 0.0
        %802 = vmatpush1.msra.mxu0 0.0
        %803 = vmatprep.subr.mxu0 0.0
        %804 = vmatpush1.msra.mxu0 0.0
        %805 = vmatprep.subr.mxu0 0.0
        %806 = vmatpush1.msra.mxu0 0.0
        %807 = vmatprep.subr.mxu0 0.0
        %808 = vmatpush1.msra.mxu0 0.0
        %809 = vmatprep.subr.mxu0 0.0
        %810 = vmatpush1.msra.mxu0 0.0
        %811 = vmatprep.subr.mxu0 0.0
        %812 = vmatpush1.msra.mxu0 0.0
        %813 = vmatprep.subr.mxu0 0.0
        %814 = vmatpush1.msra.mxu0 0.0
        %815 = vmatprep.subr.mxu0 0.0
        %816 = vmatpush1.msra.mxu0 0.0
        %817 = vmatprep.subr.mxu0 0.0
        %818 = vmatpush1.msra.mxu0 0.0
        %819 = vmatprep.subr.mxu0 0.0
        %820 = vmatpush1.msra.mxu0 0.0
        %821 = vmatprep.subr.mxu0 0.0
        %822 = vmatpush1.msra.mxu0 0.0
        %823 = vmatprep.subr.mxu0 0.0
        %824 = vmatpush1.msra.mxu0 0.0
        %825 = vmatprep.subr.mxu0 0.0
        %826 = vmatpush1.msra.mxu0 0.0
        %827 = vmatprep.subr.mxu0 0.0
        %828 = vmatpush1.msra.mxu0 0.0
        %829 = vmatprep.subr.mxu0 0.0
        %830 = vmatpush1.msra.mxu0 0.0
        %831 = vmatprep.subr.mxu0 0.0
        %832 = vmatpush1.msra.mxu0 0.0
        %833 = vmatprep.subr.mxu0 0.0
        %834 = vmatpush1.msra.mxu0 0.0
        %835 = vmatprep.subr.mxu0 0.0
        %836 = vmatpush1.msra.mxu0 0.0
        %837 = vmatprep.subr.mxu0 0.0
        %838 = vmatpush1.msra.mxu0 0.0
        %839 = vmatprep.subr.mxu0 0.0
        %840 = vmatpush1.msra.mxu0 0.0
        %841 = vmatprep.subr.mxu0 0.0
        %842 = vmatpush1.msra.mxu0 0.0
        %843 = vmatprep.subr.mxu0 0.0
        %844 = vmatpush1.msra.mxu0 0.0
        %845 = vmatprep.subr.mxu0 0.0
        %846 = vmatpush1.msra.mxu0 0.0
        %847 = vmatprep.subr.mxu0 0.0
        %848 = vmatpush1.msra.mxu0 0.0
        %849 = vmatprep.subr.mxu0 0.0
        %850 = vmatpush1.msra.mxu0 0.0
        %851 = vmatprep.subr.mxu0 0.0
        %852 = vmatpush1.msra.mxu0 0.0
        %853 = vmatprep.subr.mxu0 0.0
        %854 = vmatpush1.msra.mxu0 0.0
        %855 = vmatprep.subr.mxu0 0.0
        %856 = vmatpush1.msra.mxu0 0.0
        %857 = vmatprep.subr.mxu0 0.0
        %858 = vmatpush1.msra.mxu0 0.0
        %859 = vmatprep.mubr.f32.mxu0 0.0
        %860 = vmatmul.mubr.f32.gmra.mrb[0].mxu0 %v787
        %v861 = vpop.f32.mrb[0].mxu0
        %v862 = vadd.f32 0.0, %v861
        %v863 = vpop.f32.mrb[0].mxu0
        %864 = vmatprep.mubr.f32.mxu0 0.0
        %865 = vmatmul.mubr.f32.gmra.mrb[0].mxu0 %v789
        %v866 = vpop.f32.mrb[0].mxu0
        %v867 = vadd.f32 0.0, %v866
        %v868 = vpop.f32.mrb[0].mxu0
        %869 = vmatprep.mubr.f32.mxu0 0.0
        %870 = vmatmul.mubr.f32.gmra.mrb[0].mxu0 %v791
        %v871 = vpop.f32.mrb[0].mxu0
        %v872 = vadd.f32 0.0, %v871
        %v873 = vpop.f32.mrb[0].mxu0
        %874 = vmatprep.mubr.f32.mxu0 0.0
        %875 = vmatmul.mubr.f32.gmra.mrb[0].mxu0 %v793
        %v876 = vpop.f32.mrb[0].mxu0
        %v877 = vadd.f32 0.0, %v876
        %v878 = vpop.f32.mrb[0].mxu0
        %879 = vdwg.mxu0
        %882 = vrot.lane.b32.xlu0 %v872, 16
        %v883 = vpop.permute.xlu0 %882
        %884 = vrot.lane.b32.xlu0 %v877, 16
        %v885 = vpop.permute.xlu0 %884
        %v888 = vsel %vm540, %v862, %v883
        %v889 = vsel %vm540, %v867, %v885
        %890 = vmatprep.subr.mxu0 0.0
        %891 = vmatpush1.msra.mxu0 %v888
        %892 = vmatprep.subr.mxu0 0.0
        %893 = vmatpush1.msra.mxu0 %v889
        %894 = vmatprep.subr.mxu0 0.0
        %895 = vmatpush1.msra.mxu0 0.0
        %896 = vmatprep.subr.mxu0 0.0
        %897 = vmatpush1.msra.mxu0 0.0
        %898 = vmatprep.subr.mxu0 0.0
        %899 = vmatpush1.msra.mxu0 0.0
        %900 = vmatprep.subr.mxu0 0.0
        %901 = vmatpush1.msra.mxu0 0.0
        %902 = vmatprep.subr.mxu0 0.0
        %903 = vmatpush1.msra.mxu0 0.0
        %904 = vmatprep.subr.mxu0 0.0
        %905 = vmatpush1.msra.mxu0 0.0
        %906 = vmatprep.subr.mxu0 0.0
        %907 = vmatpush1.msra.mxu0 0.0
        %908 = vmatprep.subr.mxu0 0.0
        %909 = vmatpush1.msra.mxu0 0.0
        %910 = vmatprep.subr.mxu0 0.0
        %911 = vmatpush1.msra.mxu0 0.0
        %912 = vmatprep.subr.mxu0 0.0
        %913 = vmatpush1.msra.mxu0 0.0
        %914 = vmatprep.subr.mxu0 0.0
        %915 = vmatpush1.msra.mxu0 0.0
        %916 = vmatprep.subr.mxu0 0.0
        %917 = vmatpush1.msra.mxu0 0.0
        %918 = vmatprep.subr.mxu0 0.0
        %919 = vmatpush1.msra.mxu0 0.0
        %920 = vmatprep.subr.mxu0 0.0
        %921 = vmatpush1.msra.mxu0 0.0
        %922 = vmatprep.subr.mxu0 0.0
        %923 = vmatpush1.msra.mxu0 0.0
        %924 = vmatprep.subr.mxu0 0.0
        %925 = vmatpush1.msra.mxu0 0.0
        %926 = vmatprep.subr.mxu0 0.0
        %927 = vmatpush1.msra.mxu0 0.0
        %928 = vmatprep.subr.mxu0 0.0
        %929 = vmatpush1.msra.mxu0 0.0
        %930 = vmatprep.subr.mxu0 0.0
        %931 = vmatpush1.msra.mxu0 0.0
        %932 = vmatprep.subr.mxu0 0.0
        %933 = vmatpush1.msra.mxu0 0.0
        %934 = vmatprep.subr.mxu0 0.0
        %935 = vmatpush1.msra.mxu0 0.0
        %936 = vmatprep.subr.mxu0 0.0
        %937 = vmatpush1.msra.mxu0 0.0
        %938 = vmatprep.subr.mxu0 0.0
        %939 = vmatpush1.msra.mxu0 0.0
        %940 = vmatprep.subr.mxu0 0.0
        %941 = vmatpush1.msra.mxu0 0.0
        %942 = vmatprep.subr.mxu0 0.0
        %943 = vmatpush1.msra.mxu0 0.0
        %944 = vmatprep.subr.mxu0 0.0
        %945 = vmatpush1.msra.mxu0 0.0
        %946 = vmatprep.subr.mxu0 0.0
        %947 = vmatpush1.msra.mxu0 0.0
        %948 = vmatprep.subr.mxu0 0.0
        %949 = vmatpush1.msra.mxu0 0.0
        %950 = vmatprep.subr.mxu0 0.0
        %951 = vmatpush1.msra.mxu0 0.0
        %952 = vmatprep.subr.mxu0 0.0
        %953 = vmatpush1.msra.mxu0 0.0
        %954 = vmatprep.mubr.f32.mxu0 0.0
        %955 = vmatmul.mubr.f32.gmra.mrb[0].mxu0 %v649
        %v956 = vpop.f32.mrb[0].mxu0
        %v957 = vadd.f32 0.0, %v956
        %v958 = vpop.f32.mrb[0].mxu0
        %959 = vmatprep.mubr.f32.mxu0 0.0
        %960 = vmatmul.mubr.f32.gmra.mrb[0].mxu0 %v652
        %v961 = vpop.f32.mrb[0].mxu0
        %v962 = vadd.f32 0.0, %v961
        %v963 = vpop.f32.mrb[0].mxu0
        %964 = vdwg.mxu0
        %v965 = vmul.f32 %v957, %v307
        %v966 = vmul.f32 %v962, %v308
        %969 = vrot.lane.b32.xlu0 %v957, 112
        %v970 = vpop.permute.xlu0 %969
        %971 = vrot.lane.b32.xlu0 %v962, 112
        %v972 = vpop.permute.xlu0 %971
        %v975 = vadd.f32 %v965, %v970
        %v976 = vadd.f32 %v966, %v972
        %977 = vst.msk [vmem:[%s302] sm:$0xff] %vm540, %v975
        %978 = vst.msk [vmem:[%s302 + $0x8] sm:$0xff] %vm540, %v976
        %s979 = sand.u32 %s143, 1
        %s980 = scalar_lea.sflag [#allocation6], %s979
        %s981 = sand.u32 %s143, 1
        %s982 = smul.addr %s981, 16
        %s983 = scalar_lea.vmem [#allocation12], %s982
        // Predicated region
        $region57: #{tpu_custom_call.1} parent=35 // pred_check
          %p984 = pneg %p153
        $region58: #{tpu_custom_call.1} parent=35 // pred_check_branch
          %986 = sbr.rel (%p984) target = $region60
        $region59: #{tpu_custom_call.1} parent=35 // pred_region
          %s988 = ssub.s32 256, 256
          %989 = vsyncadd %s980, %s988
          %s990 = smul.addr %s30, 2
          %s991 = smul.addr %s29, 8
          %s992 = sadd.s32 %s990, %s991
          %s993 = smul.addr %s992, 128
          %s994 = scalar_lea.hbm %s4, %s993
          %s995 = sshll.u32 %s983, 4
          %s996 = int_to_ptr.vmem [resolvable:$true] %s995
          %1001 = dma.vmem_to_hbm [thread:$0]  %s996, 256, %s994, %s980, 128, 128, 8
        $region60: #{tpu_custom_call.1} parent=35 // pred_fallthru
          _
      $region36: #{tpu_custom_call.1} parent=5 // pred_fallthru
        _
      %p1002 = scmp.le.s32.totalorder 2, %s20
      // Predicated region
      $region61: #{tpu_custom_call.1} parent=5 // pred_check
        %p1003 = pneg %p1002
      $region62: #{tpu_custom_call.1} parent=5 // pred_check_branch
        %1005 = sbr.rel (%p1003) target = $region64
      $region63: #{tpu_custom_call.1} parent=5 // pred_region
        %s1006 = ssub.s32 %s20, 2
        // Predicated region
        $region65: #{tpu_custom_call.1} parent=63 // pred_check
          %p1007 = pneg %p159
        $region66: #{tpu_custom_call.1} parent=63 // pred_check_branch
          %1009 = sbr.rel (%p1007) target = $region68
        $region67: #{tpu_custom_call.1} parent=63 // pred_region
          %s1010 = sand.u32 %s144, 1
          %s1011 = scalar_lea.sflag [#allocation6], %s1010
          %s1012 = sand.u32 %s144, 1
          %s1013 = smul.addr %s1012, 16
          %s1014 = scalar_lea.vmem [#allocation12], %s1013
          %1015 = dma.done %s1011, 256
        $region68: #{tpu_custom_call.1} parent=63 // pred_fallthru
          _
      $region64: #{tpu_custom_call.1} parent=5 // pred_fallthru
        _
    $region6: #{tpu_custom_call.1} parent=1 // loop_footer
      %s24 = sadd.s32 1, %s20
    $region7: #{tpu_custom_call.1} parent=1 // loop_footer_branch
      %19 = sbr.rel target = $region3
    $region8: #{tpu_custom_call.1} parent=1 // loop_exit
      _
    %1016 = vsyncpa [#allocation5], 1
    %s1017 = scalar_lea.sflag [#allocation5], 1
    %1018 = vsyncpa %s1017, 1
    %1019 = vsyncpa [#allocation8], 1
    %s1020 = scalar_lea.sflag [#allocation8], 1
    %1021 = vsyncpa %s1020, 1
    %1022 = vsyncpa [#allocation11], 1
    %1023 = vsyncpa [#allocation6], 1
    %s1024 = scalar_lea.sflag [#allocation6], 1
    %1025 = vsyncpa %s1024, 1

</llo_original>
